<compile_context>
chip_gen: v5e
topology: v5e:2x2
jax: 0.10.0
libtpu: 0.0.40
codegen_flags: <defaults>
</compile_context>

<pallas_src>
import functools

import jax
import jax.numpy as jnp
from jax.experimental import pallas as pl
from jax.experimental.pallas import tpu as pltpu


# Encoder architecture (from the PyTorch module)
ENC_FILTER_SZ = [3, 3, 4, 3, 3, 1, 1, 1, 1]
ENC_STRIDES = [1, 1, 2, 1, 1, 1, 1, 1, 1]
ENC_RESIDUAL = [False, True, False, True, True, True, True, True, True]


def _layer_time_seq(t_in):
    """Time extent before layer 0, 1, ..., and after the last layer."""
    ts = [t_in]
    for k, s in zip(ENC_FILTER_SZ, ENC_STRIDES):
        ts.append((ts[-1] - k) // s + 1)
    return ts


def _round_up(x, m):
    return (x + m - 1) // m * m


def _slab_layout(c_in, c_out):
    """Row offsets of each layer's im2col weight block (+1 bias row) in the slab.

    Returns (((row_off, K*C_in), ...), total_rows).  Each layer block is padded
    to a multiple of 8 rows so in-kernel slices start sublane-aligned.
    """
    chans = [c_in] + [c_out] * (len(ENC_FILTER_SZ) - 1)
    offs, off = [], 0
    for K, cin in zip(ENC_FILTER_SZ, chans):
        kc = K * cin
        offs.append((off, kc))
        off += _round_up(kc + 1, 8)
    return tuple(offs), off


def pack_encoder_params(params):
    """Pack conv weights (im2col row order k*C_in + c_in) and biases into one slab."""
    c_in = params[0][0].shape[1]
    c_out = params[0][0].shape[2]
    offs, total = _slab_layout(c_in, c_out)
    slab = jnp.zeros((total, c_out), jnp.float32)
    for (w, b), (off, kc) in zip(params, offs):
        K, cin, cout = w.shape
        slab = slab.at[off:off + kc, :].set(w.reshape(kc, cout).astype(jnp.float32))
        slab = slab.at[off + kc, :].set(b.reshape(cout).astype(jnp.float32))
    return slab


def _num_core_groups(batch):
    """Best-effort TensorCore count for CORE_PARALLEL batch sharding.

    Conservative: falls back to 1 (single grid step, batch folded into the
    matmul M dimension) whenever the core count cannot be established.
    """
    n = 1
    try:
        info = pltpu.get_tpu_info()
        for attr in ("num_cores", "core_count", "num_tensorcores",
                     "tensorcores_per_chip"):
            v = getattr(info, attr, None)
            if isinstance(v, int) and v > 1:
                n = v
                break
    except Exception:
        n = 1
    n = max(1, min(n, batch))
    while n > 1 and batch % n:
        n -= 1
    return n


# ---------------------------------------------------------------------------
# Fused kernel: the whole 9-layer stack for one batch group (Bg elements).
#   x_ref:   (Bg*T_in, C_in)   batch blocks stacked along rows (time-major)
#   w_ref:   (R, C_out)        packed weight/bias slab (constant across grid)
#   out_ref: (Bg*T_fin, C_out)
#   act_ref: VMEM staging buffer for the stride-2 layer's input activation
# Per layer: per-batch im2col tile -> ONE MXU matmul over the whole group ->
# +bias -> ReLU -> optional center-aligned residual (l_off = (K-1)//2).
# ---------------------------------------------------------------------------
def _encoder_kernel(x_ref, w_ref, out_ref, act_ref, *, layer_cfg, bg):
    h = x_ref[...].astype(jnp.float32)  # (bg*T0, C0)

    for (K, stride, do_res, t_in, t_out, woff, kc) in layer_cfg:
        w = w_ref[woff:woff + kc, :]            # (K*C_in, C_out) im2col weights
        b = w_ref[woff + kc:woff + kc + 1, :]   # (1, C_out) bias row

        if K == 1 and stride == 1:
            cols = h                            # t_out == t_in, identity im2col
        else:
            if stride != 1:
                # Strided taps: stage in VMEM, read strided refs (pl.ds stride).
                act_ref[...] = h

                def tap(base, k):
                    return act_ref[pl.ds(base + k, t_out, stride), :]
            else:
                def tap(base, k):
                    return h[base + k: base + k + t_out, :]

            blocks = [
                jnp.concatenate([tap(bb * t_in, k) for k in range(K)], axis=1)
                for bb in range(bg)
            ]
            cols = blocks[0] if bg == 1 else jnp.concatenate(blocks, axis=0)

        y = jnp.dot(cols, w, preferred_element_type=jnp.float32) + b
        y = jnp.maximum(y, 0.0)

        if do_res:
            l_off = (K - 1) // 2
            if l_off == 0 and t_out == t_in:
                y = y + h
            else:
                res = [h[bb * t_in + l_off: bb * t_in + l_off + t_out, :]
                       for bb in range(bg)]
                y = y + (res[0] if bg == 1 else jnp.concatenate(res, axis=0))
        h = y

    out_ref[...] = h.astype(out_ref.dtype)


def encoder_forward(mels, slab, *, num_core_groups=None):
    """mels: (B, C_in, T) as in the PyTorch module; slab from pack_encoder_params.

    Returns (B, C_out, T_out)."""
    B, C_in, T_in = mels.shape
    n_out = slab.shape[1]

    offsets, total_rows = _slab_layout(C_in, n_out)
    assert slab.shape[0] == total_rows, (slab.shape, total_rows)

    ts = _layer_time_seq(T_in)
    layer_cfg = tuple(
        (K, s, r, t_i, t_o, off, kc)
        for (K, s, r, t_i, t_o, (off, kc)) in zip(
            ENC_FILTER_SZ, ENC_STRIDES, ENC_RESIDUAL, ts[:-1], ts[1:], offsets)
    )
    T_final = ts[-1]

    G = num_core_groups if num_core_groups is not None else _num_core_groups(B)
    if G < 1 or B % G:
        G = 1
    Bg = B // G

    # Scratch sized for the (single) strided layer's input activation.
    chans = [C_in] + [n_out] * (len(ENC_FILTER_SZ) - 1)
    strided = [i for i, s in enumerate(ENC_STRIDES) if s != 1]
    if strided:
        li = strided[0]
        scr_shape = (Bg * ts[li], chans[li])
    else:
        scr_shape = (8, n_out)

    # (B, C, T) -> (G, Bg*T, C): per-batch time-major blocks stacked on rows so
    # the whole batch group feeds ONE matmul per layer.  Tiny transpose/reshape,
    # fused into the surrounding jit program.
    x = jnp.transpose(mels, (0, 2, 1)).reshape(G, Bg * T_in, C_in)

    kernel = functools.partial(_encoder_kernel, layer_cfg=layer_cfg, bg=Bg)
    R = slab.shape[0]

    dim_sem = (pltpu.CORE_PARALLEL,) if G > 1 else ("arbitrary",)

    out = pl.pallas_call(
        kernel,
        out_shape=jax.ShapeDtypeStruct((G, Bg * T_final, n_out), mels.dtype),
        grid=(G,),
        in_specs=[
            pl.BlockSpec((pl.Squeezed(), Bg * T_in, C_in), lambda g: (g, 0, 0)),
            pl.BlockSpec((R, n_out), lambda g: (0, 0)),   # weight slab: one DMA, resident
        ],
        out_specs=pl.BlockSpec((pl.Squeezed(), Bg * T_final, n_out),
                               lambda g: (g, 0, 0)),
        scratch_shapes=[pltpu.VMEM(scr_shape, jnp.float32)],
        compiler_params=pltpu.CompilerParams(dimension_semantics=dim_sem),
    )(x, slab)

    out = out.reshape(B, T_final, n_out)
    return jnp.transpose(out, (0, 2, 1))  # (B, C_out, T_out)


# ---------------------------------------------------------------------------
# Encoder parameter construction (deterministic synthetic init mimicking
# PyTorch Conv1d's uniform(-1/sqrt(fan_in), 1/sqrt(fan_in)) init).
# ---------------------------------------------------------------------------
def init_encoder_params(key, n_in, n_out):
    stack_in_chan = [n_in] + [n_out] * 8
    params = []
    for cin, K in zip(stack_in_chan, ENC_FILTER_SZ):
        key, wk, bk = jax.random.split(key, 3)
        bound = 1.0 / float(cin * K) ** 0.5
        w = jax.random.uniform(wk, (K, cin, n_out), jnp.float32, -bound, bound)
        b = jax.random.uniform(bk, (1, n_out), jnp.float32, -bound, bound)
        params.append((w, b))
    return params


# ---------------------------------------------------------------------------
# Pure-JAX reference (for correctness check)
# ---------------------------------------------------------------------------
def _ref_layer(x_btc, w, b, stride, do_res):
    K = w.shape[0]
    T_in = x_btc.shape[1]
    T_out = (T_in - K) // stride + 1
    out = jnp.zeros((x_btc.shape[0], T_out, w.shape[2]), jnp.float32)
    for k in range(K):
        xk = x_btc[:, k: k + stride * (T_out - 1) + 1: stride, :]
        out = out + jnp.einsum("btc,cd->btd", xk, w[k])
    out = out + b[0]
    out = jnp.maximum(out, 0.0)
    if do_res:
        l_off = (K - 1) // 2
        out = out + x_btc[:, l_off: l_off + T_out, :]
    return out


def encoder_forward_ref(mels, params):
    x = jnp.transpose(mels, (0, 2, 1))
    for (w, b), stride, do_res in zip(params, ENC_STRIDES, ENC_RESIDUAL):
        x = _ref_layer(x, w, b, stride, do_res)
    return jnp.transpose(x, (0, 2, 1))


if __name__ == "__main__":
    # TODO(synk): the PyTorch module's rfield bookkeeping (shape assertions
    # only) is not reproduced; conv/relu/residual compute is implemented fully.
    B, n_in, n_out, T = 2, 4, 32, 40  # T shrinks 40->38->36->17->15->13 then stays 13

    key = jax.random.PRNGKey(0)
    key, xk = jax.random.split(key)
    mels = jax.random.normal(xk, (B, n_in, T), dtype=jnp.float32)  # (B, C, T)

    params = init_encoder_params(jax.random.PRNGKey(1), n_in, n_out)
    slab = pack_encoder_params(params)  # single packed weight/bias slab

    fwd = jax.jit(encoder_forward, static_argnames=("num_core_groups",))
    out = jax.block_until_ready(fwd(mels, slab))
    ref = jax.block_until_ready(encoder_forward_ref(mels, params))

    assert out.shape == (B, n_out, 13), out.shape
    assert jnp.allclose(out, ref, atol=1e-4, rtol=1e-4), float(jnp.max(jnp.abs(out - ref)))

    print("KERNEL_OK")
</pallas_src>

<mosaic_0001>
module attributes {stable_mosaic.version = 11 : i64} {
  func.func @_encoder_kernel(%arg0: i32, %arg1: memref<1x80x4xf32, #tpu.memory_space<vmem>>, %arg2: memref<624x32xf32, #tpu.memory_space<vmem>>, %arg3: memref<1x26x32xf32, #tpu.memory_space<vmem>>, %arg4: memref<72x32xf32, #tpu.memory_space<vmem>>) attributes {dimension_semantics = [#tpu.dimension_semantics<arbitrary>], iteration_bounds = array<i64: 1>, scalar_prefetch = 0 : i64, scratch_operands = 1 : i64, tpu.core_type = #tpu.core_type<tc>, window_params = [{transform_indices = @transform_0, window_bounds = array<i64: 1, 80, 4>}, {pipeline_mode = #tpu.pipeline_mode<synchronous>, transform_indices = @transform_1, window_bounds = array<i64: 624, 32>}, {transform_indices = @transform_2, window_bounds = array<i64: 1, 26, 32>}]} {
    %c0 = arith.constant 0 : index
    %c0_0 = arith.constant 0 : index
    %c0_1 = arith.constant 0 : index
    %0 = vector.load %arg1[%c0, %c0_0, %c0_1] : memref<1x80x4xf32, #tpu.memory_space<vmem>>, vector<1x80x4xf32>
    %1 = vector.shape_cast %0 : vector<1x80x4xf32> to vector<80x4xf32>
    %c0_2 = arith.constant 0 : index
    %c0_3 = arith.constant 0 : index
    %2 = vector.load %arg2[%c0_2, %c0_3] : memref<624x32xf32, #tpu.memory_space<vmem>>, vector<12x32xf32>
    %c12 = arith.constant 12 : index
    %c0_4 = arith.constant 0 : index
    %3 = vector.load %arg2[%c12, %c0_4] : memref<624x32xf32, #tpu.memory_space<vmem>>, vector<1x32xf32>
    %4 = vector.extract_strided_slice %1 {offsets = [0, 0], sizes = [38, 4], strides = [1, 1]} : vector<80x4xf32> to vector<38x4xf32>
    %5 = vector.extract_strided_slice %1 {offsets = [1, 0], sizes = [38, 4], strides = [1, 1]} : vector<80x4xf32> to vector<38x4xf32>
    %6 = vector.extract_strided_slice %1 {offsets = [2, 0], sizes = [38, 4], strides = [1, 1]} : vector<80x4xf32> to vector<38x4xf32>
    %7 = tpu.concatenate %4, %5, %6 in 1 : vector<38x4xf32>, vector<38x4xf32>, vector<38x4xf32> -> vector<38x12xf32>
    %8 = vector.extract_strided_slice %1 {offsets = [40, 0], sizes = [38, 4], strides = [1, 1]} : vector<80x4xf32> to vector<38x4xf32>
    %9 = vector.extract_strided_slice %1 {offsets = [41, 0], sizes = [38, 4], strides = [1, 1]} : vector<80x4xf32> to vector<38x4xf32>
    %10 = vector.extract_strided_slice %1 {offsets = [42, 0], sizes = [38, 4], strides = [1, 1]} : vector<80x4xf32> to vector<38x4xf32>
    %11 = tpu.concatenate %8, %9, %10 in 1 : vector<38x4xf32>, vector<38x4xf32>, vector<38x4xf32> -> vector<38x12xf32>
    %12 = tpu.concatenate %7, %11 in 0 : vector<38x12xf32>, vector<38x12xf32> -> vector<76x12xf32>
    %cst = arith.constant dense<0.000000e+00> : vector<76x32xf32>
    %13 = tpu.matmul %12, %2, %cst {dimension_numbers = #tpu.dot_dimension_numbers<[1], [0], [0], [1], [0, 0, 1, 1], [], []>} : vector<76x12xf32>, vector<12x32xf32>, vector<76x32xf32> -> vector<76x32xf32>
    %14 = vector.broadcast %3 : vector<1x32xf32> to vector<76x32xf32>
    %15 = arith.addf %13, %14 : vector<76x32xf32>
    %cst_5 = arith.constant 0.000000e+00 : f32
    %16 = vector.broadcast %cst_5 : f32 to vector<76x32xf32>
    %17 = arith.maximumf %15, %16 : vector<76x32xf32>
    %c16 = arith.constant 16 : index
    %c0_6 = arith.constant 0 : index
    %18 = vector.load %arg2[%c16, %c0_6] : memref<624x32xf32, #tpu.memory_space<vmem>>, vector<96x32xf32>
    %c112 = arith.constant 112 : index
    %c0_7 = arith.constant 0 : index
    %19 = vector.load %arg2[%c112, %c0_7] : memref<624x32xf32, #tpu.memory_space<vmem>>, vector<1x32xf32>
    %20 = vector.extract_strided_slice %17 {offsets = [0, 0], sizes = [36, 32], strides = [1, 1]} : vector<76x32xf32> to vector<36x32xf32>
    %21 = vector.extract_strided_slice %17 {offsets = [1, 0], sizes = [36, 32], strides = [1, 1]} : vector<76x32xf32> to vector<36x32xf32>
    %22 = vector.extract_strided_slice %17 {offsets = [2, 0], sizes = [36, 32], strides = [1, 1]} : vector<76x32xf32> to vector<36x32xf32>
    %23 = tpu.concatenate %20, %21, %22 in 1 : vector<36x32xf32>, vector<36x32xf32>, vector<36x32xf32> -> vector<36x96xf32>
    %24 = vector.extract_strided_slice %17 {offsets = [38, 0], sizes = [36, 32], strides = [1, 1]} : vector<76x32xf32> to vector<36x32xf32>
    %25 = vector.extract_strided_slice %17 {offsets = [39, 0], sizes = [36, 32], strides = [1, 1]} : vector<76x32xf32> to vector<36x32xf32>
    %26 = vector.extract_strided_slice %17 {offsets = [40, 0], sizes = [36, 32], strides = [1, 1]} : vector<76x32xf32> to vector<36x32xf32>
    %27 = tpu.concatenate %24, %25, %26 in 1 : vector<36x32xf32>, vector<36x32xf32>, vector<36x32xf32> -> vector<36x96xf32>
    %28 = tpu.concatenate %23, %27 in 0 : vector<36x96xf32>, vector<36x96xf32> -> vector<72x96xf32>
    %cst_8 = arith.constant dense<0.000000e+00> : vector<72x32xf32>
    %29 = tpu.matmul %28, %18, %cst_8 {dimension_numbers = #tpu.dot_dimension_numbers<[1], [0], [0], [1], [0, 0, 1, 1], [], []>} : vector<72x96xf32>, vector<96x32xf32>, vector<72x32xf32> -> vector<72x32xf32>
    %30 = vector.broadcast %19 : vector<1x32xf32> to vector<72x32xf32>
    %31 = arith.addf %29, %30 : vector<72x32xf32>
    %cst_9 = arith.constant 0.000000e+00 : f32
    %32 = vector.broadcast %cst_9 : f32 to vector<72x32xf32>
    %33 = arith.maximumf %31, %32 : vector<72x32xf32>
    %34 = vector.extract_strided_slice %17 {offsets = [1, 0], sizes = [36, 32], strides = [1, 1]} : vector<76x32xf32> to vector<36x32xf32>
    %35 = vector.extract_strided_slice %17 {offsets = [39, 0], sizes = [36, 32], strides = [1, 1]} : vector<76x32xf32> to vector<36x32xf32>
    %36 = tpu.concatenate %34, %35 in 0 : vector<36x32xf32>, vector<36x32xf32> -> vector<72x32xf32>
    %37 = arith.addf %33, %36 : vector<72x32xf32>
    %c120 = arith.constant 120 : index
    %c0_10 = arith.constant 0 : index
    %38 = vector.load %arg2[%c120, %c0_10] : memref<624x32xf32, #tpu.memory_space<vmem>>, vector<128x32xf32>
    %c248 = arith.constant 248 : index
    %c0_11 = arith.constant 0 : index
    %39 = vector.load %arg2[%c248, %c0_11] : memref<624x32xf32, #tpu.memory_space<vmem>>, vector<1x32xf32>
    %c0_12 = arith.constant 0 : index
    %c0_13 = arith.constant 0 : index
    %40 = vector.load %arg4[%c0_12, %c0_13] : memref<72x32xf32, #tpu.memory_space<vmem>>, vector<72x32xf32>
    tpu.vector_store %arg4[%c0_12, %c0_13], %37 {strides = array<i32>} : memref<72x32xf32, #tpu.memory_space<vmem>>, vector<72x32xf32>,
    %c0_14 = arith.constant 0 : index
    %c0_15 = arith.constant 0 : index
    %41 = tpu.strided_load %arg4[%c0_14, %c0_15] {strides = array<i32: 2, 1>} : memref<72x32xf32, #tpu.memory_space<vmem>>, vector<17x32xf32>
    %c1 = arith.constant 1 : index
    %c0_16 = arith.constant 0 : index
    %42 = tpu.strided_load %arg4[%c1, %c0_16] {strides = array<i32: 2, 1>} : memref<72x32xf32, #tpu.memory_space<vmem>>, vector<17x32xf32>
    %c2 = arith.constant 2 : index
    %c0_17 = arith.constant 0 : index
    %43 = tpu.strided_load %arg4[%c2, %c0_17] {strides = array<i32: 2, 1>} : memref<72x32xf32, #tpu.memory_space<vmem>>, vector<17x32xf32>
    %c3 = arith.constant 3 : index
    %c0_18 = arith.constant 0 : index
    %44 = tpu.strided_load %arg4[%c3, %c0_18] {strides = array<i32: 2, 1>} : memref<72x32xf32, #tpu.memory_space<vmem>>, vector<17x32xf32>
    %45 = tpu.concatenate %41, %42, %43, %44 in 1 : vector<17x32xf32>, vector<17x32xf32>, vector<17x32xf32>, vector<17x32xf32> -> vector<17x128xf32>
    %c36 = arith.constant 36 : index
    %c0_19 = arith.constant 0 : index
    %46 = tpu.strided_load %arg4[%c36, %c0_19] {strides = array<i32: 2, 1>} : memref<72x32xf32, #tpu.memory_space<vmem>>, vector<17x32xf32>
    %c37 = arith.constant 37 : index
    %c0_20 = arith.constant 0 : index
    %47 = tpu.strided_load %arg4[%c37, %c0_20] {strides = array<i32: 2, 1>} : memref<72x32xf32, #tpu.memory_space<vmem>>, vector<17x32xf32>
    %c38 = arith.constant 38 : index
    %c0_21 = arith.constant 0 : index
    %48 = tpu.strided_load %arg4[%c38, %c0_21] {strides = array<i32: 2, 1>} : memref<72x32xf32, #tpu.memory_space<vmem>>, vector<17x32xf32>
    %c39 = arith.constant 39 : index
    %c0_22 = arith.constant 0 : index
    %49 = tpu.strided_load %arg4[%c39, %c0_22] {strides = array<i32: 2, 1>} : memref<72x32xf32, #tpu.memory_space<vmem>>, vector<17x32xf32>
    %50 = tpu.concatenate %46, %47, %48, %49 in 1 : vector<17x32xf32>, vector<17x32xf32>, vector<17x32xf32>, vector<17x32xf32> -> vector<17x128xf32>
    %51 = tpu.concatenate %45, %50 in 0 : vector<17x128xf32>, vector<17x128xf32> -> vector<34x128xf32>
    %cst_23 = arith.constant dense<0.000000e+00> : vector<34x32xf32>
    %52 = tpu.matmul %51, %38, %cst_23 {dimension_numbers = #tpu.dot_dimension_numbers<[1], [0], [0], [1], [0, 0, 1, 1], [], []>} : vector<34x128xf32>, vector<128x32xf32>, vector<34x32xf32> -> vector<34x32xf32>
    %53 = vector.broadcast %39 : vector<1x32xf32> to vector<34x32xf32>
    %54 = arith.addf %52, %53 : vector<34x32xf32>
    %cst_24 = arith.constant 0.000000e+00 : f32
    %55 = vector.broadcast %cst_24 : f32 to vector<34x32xf32>
    %56 = arith.maximumf %54, %55 : vector<34x32xf32>
    %c256 = arith.constant 256 : index
    %c0_25 = arith.constant 0 : index
    %57 = vector.load %arg2[%c256, %c0_25] : memref<624x32xf32, #tpu.memory_space<vmem>>, vector<96x32xf32>
    %c352 = arith.constant 352 : index
    %c0_26 = arith.constant 0 : index
    %58 = vector.load %arg2[%c352, %c0_26] : memref<624x32xf32, #tpu.memory_space<vmem>>, vector<1x32xf32>
    %59 = vector.extract_strided_slice %56 {offsets = [0, 0], sizes = [15, 32], strides = [1, 1]} : vector<34x32xf32> to vector<15x32xf32>
    %60 = vector.extract_strided_slice %56 {offsets = [1, 0], sizes = [15, 32], strides = [1, 1]} : vector<34x32xf32> to vector<15x32xf32>
    %61 = vector.extract_strided_slice %56 {offsets = [2, 0], sizes = [15, 32], strides = [1, 1]} : vector<34x32xf32> to vector<15x32xf32>
    %62 = tpu.concatenate %59, %60, %61 in 1 : vector<15x32xf32>, vector<15x32xf32>, vector<15x32xf32> -> vector<15x96xf32>
    %63 = vector.extract_strided_slice %56 {offsets = [17, 0], sizes = [15, 32], strides = [1, 1]} : vector<34x32xf32> to vector<15x32xf32>
    %64 = vector.extract_strided_slice %56 {offsets = [18, 0], sizes = [15, 32], strides = [1, 1]} : vector<34x32xf32> to vector<15x32xf32>
    %65 = vector.extract_strided_slice %56 {offsets = [19, 0], sizes = [15, 32], strides = [1, 1]} : vector<34x32xf32> to vector<15x32xf32>
    %66 = tpu.concatenate %63, %64, %65 in 1 : vector<15x32xf32>, vector<15x32xf32>, vector<15x32xf32> -> vector<15x96xf32>
    %67 = tpu.concatenate %62, %66 in 0 : vector<15x96xf32>, vector<15x96xf32> -> vector<30x96xf32>
    %cst_27 = arith.constant dense<0.000000e+00> : vector<30x32xf32>
    %68 = tpu.matmul %67, %57, %cst_27 {dimension_numbers = #tpu.dot_dimension_numbers<[1], [0], [0], [1], [0, 0, 1, 1], [], []>} : vector<30x96xf32>, vector<96x32xf32>, vector<30x32xf32> -> vector<30x32xf32>
    %69 = vector.broadcast %58 : vector<1x32xf32> to vector<30x32xf32>
    %70 = arith.addf %68, %69 : vector<30x32xf32>
    %cst_28 = arith.constant 0.000000e+00 : f32
    %71 = vector.broadcast %cst_28 : f32 to vector<30x32xf32>
    %72 = arith.maximumf %70, %71 : vector<30x32xf32>
    %73 = vector.extract_strided_slice %56 {offsets = [1, 0], sizes = [15, 32], strides = [1, 1]} : vector<34x32xf32> to vector<15x32xf32>
    %74 = vector.extract_strided_slice %56 {offsets = [18, 0], sizes = [15, 32], strides = [1, 1]} : vector<34x32xf32> to vector<15x32xf32>
    %75 = tpu.concatenate %73, %74 in 0 : vector<15x32xf32>, vector<15x32xf32> -> vector<30x32xf32>
    %76 = arith.addf %72, %75 : vector<30x32xf32>
    %c360 = arith.constant 360 : index
    %c0_29 = arith.constant 0 : index
    %77 = vector.load %arg2[%c360, %c0_29] : memref<624x32xf32, #tpu.memory_space<vmem>>, vector<96x32xf32>
    %c456 = arith.constant 456 : index
    %c0_30 = arith.constant 0 : index
    %78 = vector.load %arg2[%c456, %c0_30] : memref<624x32xf32, #tpu.memory_space<vmem>>, vector<1x32xf32>
    %79 = vector.extract_strided_slice %76 {offsets = [0, 0], sizes = [13, 32], strides = [1, 1]} : vector<30x32xf32> to vector<13x32xf32>
    %80 = vector.extract_strided_slice %76 {offsets = [1, 0], sizes = [13, 32], strides = [1, 1]} : vector<30x32xf32> to vector<13x32xf32>
    %81 = vector.extract_strided_slice %76 {offsets = [2, 0], sizes = [13, 32], strides = [1, 1]} : vector<30x32xf32> to vector<13x32xf32>
    %82 = tpu.concatenate %79, %80, %81 in 1 : vector<13x32xf32>, vector<13x32xf32>, vector<13x32xf32> -> vector<13x96xf32>
    %83 = vector.extract_strided_slice %76 {offsets = [15, 0], sizes = [13, 32], strides = [1, 1]} : vector<30x32xf32> to vector<13x32xf32>
    %84 = vector.extract_strided_slice %76 {offsets = [16, 0], sizes = [13, 32], strides = [1, 1]} : vector<30x32xf32> to vector<13x32xf32>
    %85 = vector.extract_strided_slice %76 {offsets = [17, 0], sizes = [13, 32], strides = [1, 1]} : vector<30x32xf32> to vector<13x32xf32>
    %86 = tpu.concatenate %83, %84, %85 in 1 : vector<13x32xf32>, vector<13x32xf32>, vector<13x32xf32> -> vector<13x96xf32>
    %87 = tpu.concatenate %82, %86 in 0 : vector<13x96xf32>, vector<13x96xf32> -> vector<26x96xf32>
    %cst_31 = arith.constant dense<0.000000e+00> : vector<26x32xf32>
    %88 = tpu.matmul %87, %77, %cst_31 {dimension_numbers = #tpu.dot_dimension_numbers<[1], [0], [0], [1], [0, 0, 1, 1], [], []>} : vector<26x96xf32>, vector<96x32xf32>, vector<26x32xf32> -> vector<26x32xf32>
    %89 = vector.broadcast %78 : vector<1x32xf32> to vector<26x32xf32>
    %90 = arith.addf %88, %89 : vector<26x32xf32>
    %cst_32 = arith.constant 0.000000e+00 : f32
    %91 = vector.broadcast %cst_32 : f32 to vector<26x32xf32>
    %92 = arith.maximumf %90, %91 : vector<26x32xf32>
    %93 = vector.extract_strided_slice %76 {offsets = [1, 0], sizes = [13, 32], strides = [1, 1]} : vector<30x32xf32> to vector<13x32xf32>
    %94 = vector.extract_strided_slice %76 {offsets = [16, 0], sizes = [13, 32], strides = [1, 1]} : vector<30x32xf32> to vector<13x32xf32>
    %95 = tpu.concatenate %93, %94 in 0 : vector<13x32xf32>, vector<13x32xf32> -> vector<26x32xf32>
    %96 = arith.addf %92, %95 : vector<26x32xf32>
    %c464 = arith.constant 464 : index
    %c0_33 = arith.constant 0 : index
    %97 = vector.load %arg2[%c464, %c0_33] : memref<624x32xf32, #tpu.memory_space<vmem>>, vector<32x32xf32>
    %c496 = arith.constant 496 : index
    %c0_34 = arith.constant 0 : index
    %98 = vector.load %arg2[%c496, %c0_34] : memref<624x32xf32, #tpu.memory_space<vmem>>, vector<1x32xf32>
    %cst_35 = arith.constant dense<0.000000e+00> : vector<26x32xf32>
    %99 = tpu.matmul %96, %97, %cst_35 {dimension_numbers = #tpu.dot_dimension_numbers<[1], [0], [0], [1], [0, 0, 1, 1], [], []>} : vector<26x32xf32>, vector<32x32xf32>, vector<26x32xf32> -> vector<26x32xf32>
    %100 = vector.broadcast %98 : vector<1x32xf32> to vector<26x32xf32>
    %101 = arith.addf %99, %100 : vector<26x32xf32>
    %cst_36 = arith.constant 0.000000e+00 : f32
    %102 = vector.broadcast %cst_36 : f32 to vector<26x32xf32>
    %103 = arith.maximumf %101, %102 : vector<26x32xf32>
    %104 = arith.addf %103, %96 : vector<26x32xf32>
    %c504 = arith.constant 504 : index
    %c0_37 = arith.constant 0 : index
    %105 = vector.load %arg2[%c504, %c0_37] : memref<624x32xf32, #tpu.memory_space<vmem>>, vector<32x32xf32>
    %c536 = arith.constant 536 : index
    %c0_38 = arith.constant 0 : index
    %106 = vector.load %arg2[%c536, %c0_38] : memref<624x32xf32, #tpu.memory_space<vmem>>, vector<1x32xf32>
    %cst_39 = arith.constant dense<0.000000e+00> : vector<26x32xf32>
    %107 = tpu.matmul %104, %105, %cst_39 {dimension_numbers = #tpu.dot_dimension_numbers<[1], [0], [0], [1], [0, 0, 1, 1], [], []>} : vector<26x32xf32>, vector<32x32xf32>, vector<26x32xf32> -> vector<26x32xf32>
    %108 = vector.broadcast %106 : vector<1x32xf32> to vector<26x32xf32>
    %109 = arith.addf %107, %108 : vector<26x32xf32>
    %cst_40 = arith.constant 0.000000e+00 : f32
    %110 = vector.broadcast %cst_40 : f32 to vector<26x32xf32>
    %111 = arith.maximumf %109, %110 : vector<26x32xf32>
    %112 = arith.addf %111, %104 : vector<26x32xf32>
    %c544 = arith.constant 544 : index
    %c0_41 = arith.constant 0 : index
    %113 = vector.load %arg2[%c544, %c0_41] : memref<624x32xf32, #tpu.memory_space<vmem>>, vector<32x32xf32>
    %c576 = arith.constant 576 : index
    %c0_42 = arith.constant 0 : index
    %114 = vector.load %arg2[%c576, %c0_42] : memref<624x32xf32, #tpu.memory_space<vmem>>, vector<1x32xf32>
    %cst_43 = arith.constant dense<0.000000e+00> : vector<26x32xf32>
    %115 = tpu.matmul %112, %113, %cst_43 {dimension_numbers = #tpu.dot_dimension_numbers<[1], [0], [0], [1], [0, 0, 1, 1], [], []>} : vector<26x32xf32>, vector<32x32xf32>, vector<26x32xf32> -> vector<26x32xf32>
    %116 = vector.broadcast %114 : vector<1x32xf32> to vector<26x32xf32>
    %117 = arith.addf %115, %116 : vector<26x32xf32>
    %cst_44 = arith.constant 0.000000e+00 : f32
    %118 = vector.broadcast %cst_44 : f32 to vector<26x32xf32>
    %119 = arith.maximumf %117, %118 : vector<26x32xf32>
    %120 = arith.addf %119, %112 : vector<26x32xf32>
    %c584 = arith.constant 584 : index
    %c0_45 = arith.constant 0 : index
    %121 = vector.load %arg2[%c584, %c0_45] : memref<624x32xf32, #tpu.memory_space<vmem>>, vector<32x32xf32>
    %c616 = arith.constant 616 : index
    %c0_46 = arith.constant 0 : index
    %122 = vector.load %arg2[%c616, %c0_46] : memref<624x32xf32, #tpu.memory_space<vmem>>, vector<1x32xf32>
    %cst_47 = arith.constant dense<0.000000e+00> : vector<26x32xf32>
    %123 = tpu.matmul %120, %121, %cst_47 {dimension_numbers = #tpu.dot_dimension_numbers<[1], [0], [0], [1], [0, 0, 1, 1], [], []>} : vector<26x32xf32>, vector<32x32xf32>, vector<26x32xf32> -> vector<26x32xf32>
    %124 = vector.broadcast %122 : vector<1x32xf32> to vector<26x32xf32>
    %125 = arith.addf %123, %124 : vector<26x32xf32>
    %cst_48 = arith.constant 0.000000e+00 : f32
    %126 = vector.broadcast %cst_48 : f32 to vector<26x32xf32>
    %127 = arith.maximumf %125, %126 : vector<26x32xf32>
    %128 = arith.addf %127, %120 : vector<26x32xf32>
    %c0_49 = arith.constant 0 : index
    %c0_50 = arith.constant 0 : index
    %c0_51 = arith.constant 0 : index
    %129 = vector.load %arg3[%c0_49, %c0_50, %c0_51] : memref<1x26x32xf32, #tpu.memory_space<vmem>>, vector<1x26x32xf32>
    %130 = vector.shape_cast %129 : vector<1x26x32xf32> to vector<26x32xf32>
    %131 = vector.shape_cast %128 : vector<26x32xf32> to vector<1x26x32xf32>
    tpu.vector_store %arg3[%c0_49, %c0_50, %c0_51], %131 {strides = array<i32>} : memref<1x26x32xf32, #tpu.memory_space<vmem>>, vector<1x26x32xf32>,
    return
  }
  func.func @transform_0(%arg0: i32) -> (i32, i32, i32) {
    %c0_i32 = arith.constant 0 : i32
    %c0_i32_0 = arith.constant 0 : i32
    %c0_i32_1 = arith.constant 0 : i32
    return %arg0, %c0_i32, %c0_i32_0 : i32, i32, i32
  }
  func.func @transform_1(%arg0: i32) -> (i32, i32) {
    %c0_i32 = arith.constant 0 : i32
    %c0_i32_0 = arith.constant 0 : i32
    %c0_i32_1 = arith.constant 0 : i32
    return %c0_i32, %c0_i32_0 : i32, i32
  }
  func.func @transform_2(%arg0: i32) -> (i32, i32, i32) {
    %c0_i32 = arith.constant 0 : i32
    %c0_i32_0 = arith.constant 0 : i32
    %c0_i32_1 = arith.constant 0 : i32
    return %arg0, %c0_i32, %c0_i32_0 : i32, i32, i32
  }
}

</mosaic_0001>

<llo_original>
// kernel: encoder_forward.1
$region0: #{encoder_forward.1}
  #allocation0 [shape = 'u32[]', space=smem, size = 0x4, offset = 0x4, fixed_abs, tag = 'smem constant byte address 0x4 - core index']
  #allocation1 [shape = 'u32[72,128]{1,0:T(1,128)}', space=vmem, size = 0x9000, scoped, tag = 'internal scratch']
  #allocation2 [shape = 'f32[72,32]{1,0:T(8,128)}', space=vmem, size = 0x9000, scoped, tag = 'scratch operand']
  %s0 = inlined_call_operand.vmem [shape: f32[1,80,4], index: 0, kind: input, shape index: {}]
  %s1 = inlined_call_operand.vmem [shape: f32[624,32], index: 1, kind: input, shape index: {}]
  %s2 = inlined_call_operand.vmem [shape: f32[1,26,32], index: 2, kind: output, shape index: {}]
  %s3 = sld [smem:[#allocation0]]
  $region18: #{encoder_forward.1} parent=0
    _
  %s5 = ssub.s32 1, %s3
  %s6 = scalar_select 0, %s5, %s3
  // Predicated region
  $region2: #{encoder_forward.1} parent=0 // pred_check
    _
  $region3: #{encoder_forward.1} parent=0 // pred_check_branch
    %8 = sbr.rel (0) target = $region5
  $region4: #{encoder_forward.1} parent=0 // pred_region
    _
  $region5: #{encoder_forward.1} parent=0 // pred_fallthru
    _
  // Predicated region
  $region6: #{encoder_forward.1} parent=0 // pred_check
    _
  $region7: #{encoder_forward.1} parent=0 // pred_check_branch
    %10 = sbr.rel (0) target = $region9
  $region8: #{encoder_forward.1} parent=0 // pred_region
    _
  $region9: #{encoder_forward.1} parent=0 // pred_fallthru
    _
  %v11 = vld [vmem:[%s0] sm:$0xff]
  %v12 = vld [vmem:[%s0 + $0x8] sm:$0xff]
  %v13 = vld [vmem:[%s0 + $0x10] sm:$0xff]
  %v14 = vld [vmem:[%s0 + $0x18] sm:$0xff]
  %v15 = vld [vmem:[%s0 + $0x20] sm:$0xff]
  %v16 = vld [vmem:[%s0 + $0x28] sm:$0xff]
  %v17 = vld [vmem:[%s0 + $0x30] sm:$0xff]
  %v18 = vld [vmem:[%s0 + $0x38] sm:$0xff]
  %v19 = vld [vmem:[%s0 + $0x40] sm:$0xff]
  %v20 = vld [vmem:[%s0 + $0x48] sm:$0xff]
  %v21 = vld [vmem:[%s1] sm:$0xff]
  %v22 = vld [vmem:[%s1 + $0x8] sm:$0xf]
  %v23 = vld [vmem:[%s1 + $0xc] sm:$0x1]
  %vm29 = vcmask 1046528
  %v30 = vrot.slane %v11, 1
  %v31 = vrot.slane %v12, 1
  %v32 = vsel %vm29, %v30, %v31
  %v33 = vrot.slane %v13, 1
  %v34 = vsel %vm29, %v31, %v33
  %v35 = vrot.slane %v14, 1
  %v36 = vsel %vm29, %v33, %v35
  %v37 = vrot.slane %v15, 1
  %v38 = vsel %vm29, %v35, %v37
  %39 = vrot.lane.b32.xlu0 %v32, 4
  %v40 = vpop.permute.xlu0 %39
  %41 = vrot.lane.b32.xlu0 %v34, 4
  %v42 = vpop.permute.xlu0 %41
  %43 = vrot.lane.b32.xlu0 %v36, 4
  %v44 = vpop.permute.xlu0 %43
  %45 = vrot.lane.b32.xlu0 %v38, 4
  %v46 = vpop.permute.xlu0 %45
  %47 = vrot.lane.b32.xlu0 %v37, 4
  %v48 = vpop.permute.xlu0 %47
  %vm54 = vcmask 1045504
  %v55 = vrot.slane %v11, 2
  %v56 = vrot.slane %v12, 2
  %v57 = vsel %vm54, %v55, %v56
  %v58 = vrot.slane %v13, 2
  %v59 = vsel %vm54, %v56, %v58
  %v60 = vrot.slane %v14, 2
  %v61 = vsel %vm54, %v58, %v60
  %v62 = vrot.slane %v15, 2
  %v63 = vsel %vm54, %v60, %v62
  %64 = vrot.lane.b32.xlu0 %v57, 8
  %v65 = vpop.permute.xlu0 %64
  %66 = vrot.lane.b32.xlu0 %v59, 8
  %v67 = vpop.permute.xlu0 %66
  %68 = vrot.lane.b32.xlu0 %v61, 8
  %v69 = vpop.permute.xlu0 %68
  %70 = vrot.lane.b32.xlu0 %v63, 8
  %v71 = vpop.permute.xlu0 %70
  %72 = vrot.lane.b32.xlu0 %v62, 8
  %v73 = vpop.permute.xlu0 %72
  %vm79 = vcmask 31744
  %v80 = vsel %vm79, %v11, %v40
  %v81 = vsel %vm79, %v12, %v42
  %v82 = vsel %vm79, %v13, %v44
  %v83 = vsel %vm79, %v14, %v46
  %v84 = vsel %vm79, %v15, %v48
  %vm85 = vcmask 64512
  %v86 = vsel %vm85, %v80, %v65
  %v87 = vsel %vm85, %v81, %v67
  %v88 = vsel %vm85, %v82, %v69
  %v89 = vsel %vm85, %v83, %v71
  %v90 = vsel %vm85, %v84, %v73
  %v96 = vrot.slane %v16, 1
  %v97 = vrot.slane %v17, 1
  %v98 = vsel %vm29, %v96, %v97
  %v99 = vrot.slane %v18, 1
  %v100 = vsel %vm29, %v97, %v99
  %v101 = vrot.slane %v19, 1
  %v102 = vsel %vm29, %v99, %v101
  %v103 = vrot.slane %v20, 1
  %v104 = vsel %vm29, %v101, %v103
  %105 = vrot.lane.b32.xlu0 %v98, 4
  %v106 = vpop.permute.xlu0 %105
  %107 = vrot.lane.b32.xlu0 %v100, 4
  %v108 = vpop.permute.xlu0 %107
  %109 = vrot.lane.b32.xlu0 %v102, 4
  %v110 = vpop.permute.xlu0 %109
  %111 = vrot.lane.b32.xlu0 %v104, 4
  %v112 = vpop.permute.xlu0 %111
  %113 = vrot.lane.b32.xlu0 %v103, 4
  %v114 = vpop.permute.xlu0 %113
  %v120 = vrot.slane %v16, 2
  %v121 = vrot.slane %v17, 2
  %v122 = vsel %vm54, %v120, %v121
  %v123 = vrot.slane %v18, 2
  %v124 = vsel %vm54, %v121, %v123
  %v125 = vrot.slane %v19, 2
  %v126 = vsel %vm54, %v123, %v125
  %v127 = vrot.slane %v20, 2
  %v128 = vsel %vm54, %v125, %v127
  %129 = vrot.lane.b32.xlu0 %v122, 8
  %v130 = vpop.permute.xlu0 %129
  %131 = vrot.lane.b32.xlu0 %v124, 8
  %v132 = vpop.permute.xlu0 %131
  %133 = vrot.lane.b32.xlu0 %v126, 8
  %v134 = vpop.permute.xlu0 %133
  %135 = vrot.lane.b32.xlu0 %v128, 8
  %v136 = vpop.permute.xlu0 %135
  %137 = vrot.lane.b32.xlu0 %v127, 8
  %v138 = vpop.permute.xlu0 %137
  %v144 = vsel %vm79, %v16, %v106
  %v145 = vsel %vm79, %v17, %v108
  %v146 = vsel %vm79, %v18, %v110
  %v147 = vsel %vm79, %v19, %v112
  %v148 = vsel %vm79, %v20, %v114
  %v149 = vsel %vm85, %v144, %v130
  %v150 = vsel %vm85, %v145, %v132
  %v151 = vsel %vm85, %v146, %v134
  %v152 = vsel %vm85, %v147, %v136
  %v153 = vsel %vm85, %v148, %v138
  %v159 = vrot.slane %v149, 2
  %v160 = vrot.slane %v150, 2
  %v161 = vsel %vm54, %v159, %v160
  %v162 = vrot.slane %v151, 2
  %v163 = vsel %vm54, %v160, %v162
  %v164 = vrot.slane %v152, 2
  %v165 = vsel %vm54, %v162, %v164
  %v166 = vrot.slane %v153, 2
  %v167 = vsel %vm54, %v164, %v166
  %v169 = vsel %vm54, %v90, %v159
  %v170 = vperm.slane %v23, 0
  %vm171 = vcmask 97280
  %v173 = vsel %vm171, %v86, 0
  %v176 = vsel %vm171, %v87, 0
  %v179 = vsel %vm171, %v88, 0
  %v182 = vsel %vm171, %v89, 0
  %v185 = vsel %vm171, %v169, 0
  %v187 = vsel %vm171, %v161, 0
  %v189 = vsel %vm171, %v163, 0
  %v191 = vsel %vm171, %v165, 0
  %v193 = vsel %vm171, %v167, 0
  %v195 = vsel %vm171, %v166, 0
  %vm197 = vcmask 1043456
  %v199 = vsel %vm197, %v22, 0
  %201 = vmatpush.msra.mxu0 0.0
  %202 = vmatpush.msra.mxu0 0.0
  %203 = vmatpush.msra.mxu0 0.0
  %204 = vmatpush.msra.mxu0 0.0
  %205 = vmatpush.msra.mxu0 0.0
  %206 = vmatpush.msra.mxu0 0.0
  %207 = vmatpush.msra.mxu0 0.0
  %208 = vmatpush.msra.mxu0 0.0
  %209 = vmatpush.msra.mxu0 0.0
  %210 = vmatpush.msra.mxu0 0.0
  %211 = vmatpush.msra.mxu0 0.0
  %212 = vmatpush.msra.mxu0 0.0
  %213 = vmatpush.msra.mxu0 0.0
  %214 = vmatpush.msra.mxu0 0.0
  %215 = vmatpush.msra.mxu0 %v199
  %216 = vmatpush.msra.mxu0 %v21
  %217 = vmatmul.f32.gmra.mxu0 %v173
  %v218 = vpop.f32.mrf.mxu0
  %v219 = vadd.f32 %v170, %v218
  %220 = vmatmul.f32.gmra.mxu0 %v176
  %v221 = vpop.f32.mrf.mxu0
  %v222 = vadd.f32 %v170, %v221
  %223 = vmatmul.f32.gmra.mxu0 %v179
  %v224 = vpop.f32.mrf.mxu0
  %v225 = vadd.f32 %v170, %v224
  %226 = vmatmul.f32.gmra.mxu0 %v182
  %v227 = vpop.f32.mrf.mxu0
  %v228 = vadd.f32 %v170, %v227
  %229 = vmatmul.f32.gmra.mxu0 %v185
  %v230 = vpop.f32.mrf.mxu0
  %v231 = vadd.f32 %v170, %v230
  %232 = vmatmul.f32.gmra.mxu0 %v187
  %v233 = vpop.f32.mrf.mxu0
  %v234 = vadd.f32 %v170, %v233
  %235 = vmatmul.f32.gmra.mxu0 %v189
  %v236 = vpop.f32.mrf.mxu0
  %v237 = vadd.f32 %v170, %v236
  %238 = vmatmul.f32.gmra.mxu0 %v191
  %v239 = vpop.f32.mrf.mxu0
  %v240 = vadd.f32 %v170, %v239
  %241 = vmatmul.f32.gmra.mxu0 %v193
  %v242 = vpop.f32.mrf.mxu0
  %v243 = vadd.f32 %v170, %v242
  %244 = vmatmul.f32.gmra.mxu0 %v195
  %v245 = vpop.f32.mrf.mxu0
  %v246 = vadd.f32 %v170, %v245
  %247 = vdwg.mxu0
  %v248 = vmax.f32 %v219, 0.0
  %v249 = vmax.f32 %v222, 0.0
  %v250 = vmax.f32 %v225, 0.0
  %v251 = vmax.f32 %v228, 0.0
  %v252 = vmax.f32 %v231, 0.0
  %v253 = vmax.f32 %v234, 0.0
  %v254 = vmax.f32 %v237, 0.0
  %v255 = vmax.f32 %v240, 0.0
  %v256 = vmax.f32 %v243, 0.0
  %v257 = vmax.f32 %v246, 0.0
  %v258 = vld [vmem:[%s1 + $0x10] sm:$0xff]
  %v259 = vld [vmem:[%s1 + $0x18] sm:$0xff]
  %v260 = vld [vmem:[%s1 + $0x20] sm:$0xff]
  %v261 = vld [vmem:[%s1 + $0x28] sm:$0xff]
  %v262 = vld [vmem:[%s1 + $0x30] sm:$0xff]
  %v263 = vld [vmem:[%s1 + $0x38] sm:$0xff]
  %v264 = vld [vmem:[%s1 + $0x40] sm:$0xff]
  %v265 = vld [vmem:[%s1 + $0x48] sm:$0xff]
  %v266 = vld [vmem:[%s1 + $0x50] sm:$0xff]
  %v267 = vld [vmem:[%s1 + $0x58] sm:$0xff]
  %v268 = vld [vmem:[%s1 + $0x60] sm:$0xff]
  %v269 = vld [vmem:[%s1 + $0x68] sm:$0xff]
  %v270 = vld [vmem:[%s1 + $0x70] sm:$0x1]
  %v276 = vrot.slane %v248, 1
  %v277 = vrot.slane %v249, 1
  %v278 = vsel %vm29, %v276, %v277
  %v279 = vrot.slane %v250, 1
  %v280 = vsel %vm29, %v277, %v279
  %v281 = vrot.slane %v251, 1
  %v282 = vsel %vm29, %v279, %v281
  %v283 = vrot.slane %v252, 1
  %v284 = vsel %vm29, %v281, %v283
  %285 = vrot.lane.b32.xlu0 %v278, 32
  %v286 = vpop.permute.xlu0 %285
  %287 = vrot.lane.b32.xlu0 %v280, 32
  %v288 = vpop.permute.xlu0 %287
  %289 = vrot.lane.b32.xlu0 %v282, 32
  %v290 = vpop.permute.xlu0 %289
  %291 = vrot.lane.b32.xlu0 %v284, 32
  %v292 = vpop.permute.xlu0 %291
  %293 = vrot.lane.b32.xlu0 %v283, 32
  %v294 = vpop.permute.xlu0 %293
  %v300 = vrot.slane %v248, 2
  %v301 = vrot.slane %v249, 2
  %v302 = vsel %vm54, %v300, %v301
  %v303 = vrot.slane %v250, 2
  %v304 = vsel %vm54, %v301, %v303
  %v305 = vrot.slane %v251, 2
  %v306 = vsel %vm54, %v303, %v305
  %v307 = vrot.slane %v252, 2
  %v308 = vsel %vm54, %v305, %v307
  %309 = vrot.lane.b32.xlu0 %v302, 64
  %v310 = vpop.permute.xlu0 %309
  %311 = vrot.lane.b32.xlu0 %v304, 64
  %v312 = vpop.permute.xlu0 %311
  %313 = vrot.lane.b32.xlu0 %v306, 64
  %v314 = vpop.permute.xlu0 %313
  %315 = vrot.lane.b32.xlu0 %v308, 64
  %v316 = vpop.permute.xlu0 %315
  %317 = vrot.lane.b32.xlu0 %v307, 64
  %v318 = vpop.permute.xlu0 %317
  %vm324 = vcmask 261120
  %v325 = vsel %vm324, %v248, %v286
  %v326 = vsel %vm324, %v249, %v288
  %v327 = vsel %vm324, %v250, %v290
  %v328 = vsel %vm324, %v251, %v292
  %v329 = vsel %vm324, %v252, %v294
  %vm330 = vcmask 523264
  %v331 = vsel %vm330, %v325, %v310
  %v332 = vsel %vm330, %v326, %v312
  %v333 = vsel %vm330, %v327, %v314
  %v334 = vsel %vm330, %v328, %v316
  %v335 = vsel %vm330, %v329, %v318
  %v341 = vrot.slane %v253, 1
  %v342 = vsel %vm29, %v283, %v341
  %v343 = vrot.slane %v254, 1
  %v344 = vsel %vm29, %v341, %v343
  %v345 = vrot.slane %v255, 1
  %v346 = vsel %vm29, %v343, %v345
  %v347 = vrot.slane %v256, 1
  %v348 = vsel %vm29, %v345, %v347
  %v349 = vrot.slane %v257, 1
  %v350 = vsel %vm29, %v347, %v349
  %351 = vrot.lane.b32.xlu0 %v342, 32
  %v352 = vpop.permute.xlu0 %351
  %353 = vrot.lane.b32.xlu0 %v344, 32
  %v354 = vpop.permute.xlu0 %353
  %355 = vrot.lane.b32.xlu0 %v346, 32
  %v356 = vpop.permute.xlu0 %355
  %357 = vrot.lane.b32.xlu0 %v348, 32
  %v358 = vpop.permute.xlu0 %357
  %359 = vrot.lane.b32.xlu0 %v350, 32
  %v360 = vpop.permute.xlu0 %359
  %361 = vrot.lane.b32.xlu0 %v349, 32
  %v362 = vpop.permute.xlu0 %361
  %v369 = vrot.slane %v253, 2
  %v370 = vrot.slane %v254, 2
  %v371 = vsel %vm54, %v369, %v370
  %v372 = vrot.slane %v255, 2
  %v373 = vsel %vm54, %v370, %v372
  %v374 = vrot.slane %v256, 2
  %v375 = vsel %vm54, %v372, %v374
  %v376 = vrot.slane %v257, 2
  %v377 = vsel %vm54, %v374, %v376
  %378 = vrot.lane.b32.xlu0 %v369, 64
  %v379 = vpop.permute.xlu0 %378
  %380 = vrot.lane.b32.xlu0 %v371, 64
  %v381 = vpop.permute.xlu0 %380
  %382 = vrot.lane.b32.xlu0 %v373, 64
  %v383 = vpop.permute.xlu0 %382
  %384 = vrot.lane.b32.xlu0 %v375, 64
  %v385 = vpop.permute.xlu0 %384
  %386 = vrot.lane.b32.xlu0 %v377, 64
  %v387 = vpop.permute.xlu0 %386
  %388 = vrot.lane.b32.xlu0 %v376, 64
  %v389 = vpop.permute.xlu0 %388
  %v396 = vsel %vm324, %v252, %v352
  %v397 = vsel %vm324, %v253, %v354
  %v398 = vsel %vm324, %v254, %v356
  %v399 = vsel %vm324, %v255, %v358
  %v400 = vsel %vm324, %v256, %v360
  %v401 = vsel %vm324, %v257, %v362
  %v402 = vsel %vm330, %v396, %v379
  %v403 = vsel %vm330, %v397, %v381
  %v404 = vsel %vm330, %v398, %v383
  %v405 = vsel %vm330, %v399, %v385
  %v406 = vsel %vm330, %v400, %v387
  %v407 = vsel %vm330, %v401, %v389
  %v414 = vrot.slane %v402, 2
  %v415 = vrot.slane %v403, 2
  %v416 = vsel %vm54, %v414, %v415
  %v417 = vrot.slane %v404, 2
  %v418 = vsel %vm54, %v415, %v417
  %v419 = vrot.slane %v405, 2
  %v420 = vsel %vm54, %v417, %v419
  %v421 = vrot.slane %v406, 2
  %v422 = vsel %vm54, %v419, %v421
  %v423 = vrot.slane %v407, 2
  %v424 = vsel %vm54, %v421, %v423
  %v426 = vsel %vm197, %v335, %v416
  %v427 = vperm.slane %v270, 0
  %vm428 = vcmask 785408
  %v430 = vsel %vm428, %v331, 0
  %v433 = vsel %vm428, %v332, 0
  %v436 = vsel %vm428, %v333, 0
  %v439 = vsel %vm428, %v334, 0
  %v442 = vsel %vm428, %v426, 0
  %v444 = vsel %vm428, %v418, 0
  %v446 = vsel %vm428, %v420, 0
  %v448 = vsel %vm428, %v422, 0
  %v450 = vsel %vm428, %v424, 0
  %452 = vmatpush.msra.mxu0 0.0
  %453 = vmatpush.msra.mxu0 0.0
  %454 = vmatpush.msra.mxu0 0.0
  %455 = vmatpush.msra.mxu0 0.0
  %456 = vmatpush.msra.mxu0 %v269
  %457 = vmatpush.msra.mxu0 %v268
  %458 = vmatpush.msra.mxu0 %v267
  %459 = vmatpush.msra.mxu0 %v266
  %460 = vmatpush.msra.mxu0 %v265
  %461 = vmatpush.msra.mxu0 %v264
  %462 = vmatpush.msra.mxu0 %v263
  %463 = vmatpush.msra.mxu0 %v262
  %464 = vmatpush.msra.mxu0 %v261
  %465 = vmatpush.msra.mxu0 %v260
  %466 = vmatpush.msra.mxu0 %v259
  %467 = vmatpush.msra.mxu0 %v258
  %468 = vmatmul.f32.gmra.mxu0 %v430
  %v469 = vpop.f32.mrf.mxu0
  %v470 = vadd.f32 %v427, %v469
  %471 = vmatmul.f32.gmra.mxu0 %v433
  %v472 = vpop.f32.mrf.mxu0
  %v473 = vadd.f32 %v427, %v472
  %474 = vmatmul.f32.gmra.mxu0 %v436
  %v475 = vpop.f32.mrf.mxu0
  %v476 = vadd.f32 %v427, %v475
  %477 = vmatmul.f32.gmra.mxu0 %v439
  %v478 = vpop.f32.mrf.mxu0
  %v479 = vadd.f32 %v427, %v478
  %480 = vmatmul.f32.gmra.mxu0 %v442
  %v481 = vpop.f32.mrf.mxu0
  %v482 = vadd.f32 %v427, %v481
  %483 = vmatmul.f32.gmra.mxu0 %v444
  %v484 = vpop.f32.mrf.mxu0
  %v485 = vadd.f32 %v427, %v484
  %486 = vmatmul.f32.gmra.mxu0 %v446
  %v487 = vpop.f32.mrf.mxu0
  %v488 = vadd.f32 %v427, %v487
  %489 = vmatmul.f32.gmra.mxu0 %v448
  %v490 = vpop.f32.mrf.mxu0
  %v491 = vadd.f32 %v427, %v490
  %492 = vmatmul.f32.gmra.mxu0 %v450
  %v493 = vpop.f32.mrf.mxu0
  %v494 = vadd.f32 %v427, %v493
  %495 = vdwg.mxu0
  %v496 = vmax.f32 %v470, 0.0
  %v497 = vmax.f32 %v473, 0.0
  %v498 = vmax.f32 %v476, 0.0
  %v499 = vmax.f32 %v479, 0.0
  %v500 = vmax.f32 %v482, 0.0
  %v501 = vmax.f32 %v485, 0.0
  %v502 = vmax.f32 %v488, 0.0
  %v503 = vmax.f32 %v491, 0.0
  %v504 = vmax.f32 %v494, 0.0
  %vm510 = vcmask 1044480
  %v511 = vrot.slane %v252, 3
  %v512 = vrot.slane %v253, 3
  %v513 = vsel %vm510, %v511, %v512
  %v514 = vrot.slane %v254, 3
  %v515 = vsel %vm510, %v512, %v514
  %v516 = vrot.slane %v255, 3
  %v517 = vsel %vm510, %v514, %v516
  %v518 = vrot.slane %v256, 3
  %v519 = vsel %vm510, %v516, %v518
  %v520 = vrot.slane %v257, 3
  %v521 = vsel %vm510, %v518, %v520
  %v527 = vsel %vm197, %v283, %v513
  %v528 = vadd.f32 %v496, %v278
  %v529 = vadd.f32 %v497, %v280
  %v530 = vadd.f32 %v498, %v282
  %v531 = vadd.f32 %v499, %v284
  %v532 = vadd.f32 %v500, %v527
  %v533 = vadd.f32 %v501, %v515
  %v534 = vadd.f32 %v502, %v517
  %v535 = vadd.f32 %v503, %v519
  %v536 = vadd.f32 %v504, %v521
  %v537 = vld [vmem:[%s1 + $0x78] sm:$0xff]
  %v538 = vld [vmem:[%s1 + $0x80] sm:$0xff]
  %v539 = vld [vmem:[%s1 + $0x88] sm:$0xff]
  %v540 = vld [vmem:[%s1 + $0x90] sm:$0xff]
  %v541 = vld [vmem:[%s1 + $0x98] sm:$0xff]
  %v542 = vld [vmem:[%s1 + $0xa0] sm:$0xff]
  %v543 = vld [vmem:[%s1 + $0xa8] sm:$0xff]
  %v544 = vld [vmem:[%s1 + $0xb0] sm:$0xff]
  %v545 = vld [vmem:[%s1 + $0xb8] sm:$0xff]
  %v546 = vld [vmem:[%s1 + $0xc0] sm:$0xff]
  %v547 = vld [vmem:[%s1 + $0xc8] sm:$0xff]
  %v548 = vld [vmem:[%s1 + $0xd0] sm:$0xff]
  %v549 = vld [vmem:[%s1 + $0xd8] sm:$0xff]
  %v550 = vld [vmem:[%s1 + $0xe0] sm:$0xff]
  %v551 = vld [vmem:[%s1 + $0xe8] sm:$0xff]
  %v552 = vld [vmem:[%s1 + $0xf0] sm:$0xff]
  %v553 = vld [vmem:[%s1 + $0xf8] sm:$0x1]
  %554 = vst.msk [vmem:[#allocation2] sm:$0xff] %vm324, %v528
  %555 = vst.msk [vmem:[#allocation2 + $0x8] sm:$0xff] %vm324, %v529
  %556 = vst.msk [vmem:[#allocation2 + $0x10] sm:$0xff] %vm324, %v530
  %557 = vst.msk [vmem:[#allocation2 + $0x18] sm:$0xff] %vm324, %v531
  %558 = vst.msk [vmem:[#allocation2 + $0x20] sm:$0xff] %vm324, %v532
  %559 = vst.msk [vmem:[#allocation2 + $0x28] sm:$0xff] %vm324, %v533
  %560 = vst.msk [vmem:[#allocation2 + $0x30] sm:$0xff] %vm324, %v534
  %561 = vst.msk [vmem:[#allocation2 + $0x38] sm:$0xff] %vm324, %v535
  %562 = vst.msk [vmem:[#allocation2 + $0x40] sm:$0xff] %vm324, %v536
  %v563 = vld [vmem:[#allocation2] ss:$2 sm:$0xff]
  %s564 = scalar_lea.vmem [#allocation2], 16
  %v565 = vld [vmem:[%s564] ss:$2 sm:$0xff]
  %s566 = scalar_lea.vmem [#allocation2], 32
  %v567 = vld [vmem:[%s566] ss:$2 sm:$0x1]
  %s568 = scalar_lea.vmem [#allocation2], 1
  %v569 = vld [vmem:[%s568] ss:$2 sm:$0xff]
  %s570 = scalar_lea.vmem [#allocation2], 17
  %v571 = vld [vmem:[%s570] ss:$2 sm:$0xff]
  %s572 = scalar_lea.vmem [#allocation2], 33
  %v573 = vld [vmem:[%s572] ss:$2 sm:$0x1]
  %s574 = scalar_lea.vmem [#allocation2], 2
  %v575 = vld [vmem:[%s574] ss:$2 sm:$0xff]
  %s576 = scalar_lea.vmem [#allocation2], 18
  %v577 = vld [vmem:[%s576] ss:$2 sm:$0xff]
  %s578 = scalar_lea.vmem [#allocation2], 34
  %v579 = vld [vmem:[%s578] ss:$2 sm:$0x1]
  %s580 = scalar_lea.vmem [#allocation2], 3
  %v581 = vld [vmem:[%s580] ss:$2 sm:$0xff]
  %s582 = scalar_lea.vmem [#allocation2], 19
  %v583 = vld [vmem:[%s582] ss:$2 sm:$0xff]
  %s584 = scalar_lea.vmem [#allocation2], 35
  %v585 = vld [vmem:[%s584] ss:$2 sm:$0x1]
  %589 = vrot.lane.b32.xlu0 %v569, 32
  %v590 = vpop.permute.xlu0 %589
  %591 = vrot.lane.b32.xlu0 %v571, 32
  %v592 = vpop.permute.xlu0 %591
  %593 = vrot.lane.b32.xlu0 %v573, 32
  %v594 = vpop.permute.xlu0 %593
  %601 = vrot.lane.b32.xlu0 %v575, 64
  %v602 = vpop.permute.xlu0 %601
  %603 = vrot.lane.b32.xlu0 %v577, 64
  %v604 = vpop.permute.xlu0 %603
  %605 = vrot.lane.b32.xlu0 %v579, 64
  %v606 = vpop.permute.xlu0 %605
  %613 = vrot.lane.b32.xlu0 %v581, 96
  %v614 = vpop.permute.xlu0 %613
  %615 = vrot.lane.b32.xlu0 %v583, 96
  %v616 = vpop.permute.xlu0 %615
  %617 = vrot.lane.b32.xlu0 %v585, 96
  %v618 = vpop.permute.xlu0 %617
  %v622 = vsel %vm324, %v563, %v590
  %v623 = vsel %vm324, %v565, %v592
  %v624 = vsel %vm324, %v567, %v594
  %v625 = vsel %vm330, %v622, %v602
  %v626 = vsel %vm330, %v623, %v604
  %v627 = vsel %vm330, %v624, %v606
  %v628 = vsel %vm428, %v625, %v614
  %v629 = vsel %vm428, %v626, %v616
  %v630 = vsel %vm428, %v627, %v618
  %s631 = scalar_lea.vmem [#allocation2], 36
  %v632 = vld [vmem:[%s631] ss:$2 sm:$0xff]
  %s633 = scalar_lea.vmem [#allocation2], 52
  %v634 = vld [vmem:[%s633] ss:$2 sm:$0xff]
  %s635 = scalar_lea.vmem [#allocation2], 68
  %v636 = vld [vmem:[%s635] ss:$2 sm:$0x1]
  %s637 = scalar_lea.vmem [#allocation2], 37
  %v638 = vld [vmem:[%s637] ss:$2 sm:$0xff]
  %s639 = scalar_lea.vmem [#allocation2], 53
  %v640 = vld [vmem:[%s639] ss:$2 sm:$0xff]
  %s641 = scalar_lea.vmem [#allocation2], 69
  %v642 = vld [vmem:[%s641] ss:$2 sm:$0x1]
  %s643 = scalar_lea.vmem [#allocation2], 38
  %v644 = vld [vmem:[%s643] ss:$2 sm:$0xff]
  %s645 = scalar_lea.vmem [#allocation2], 54
  %v646 = vld [vmem:[%s645] ss:$2 sm:$0xff]
  %s647 = scalar_lea.vmem [#allocation2], 70
  %v648 = vld [vmem:[%s647] ss:$2 sm:$0x1]
  %s649 = scalar_lea.vmem [#allocation2], 39
  %v650 = vld [vmem:[%s649] ss:$2 sm:$0xff]
  %s651 = scalar_lea.vmem [#allocation2], 55
  %v652 = vld [vmem:[%s651] ss:$2 sm:$0xff]
  %s653 = scalar_lea.vmem [#allocation2], 71
  %v654 = vld [vmem:[%s653] ss:$2 sm:$0x1]
  %658 = vrot.lane.b32.xlu0 %v638, 32
  %v659 = vpop.permute.xlu0 %658
  %660 = vrot.lane.b32.xlu0 %v640, 32
  %v661 = vpop.permute.xlu0 %660
  %662 = vrot.lane.b32.xlu0 %v642, 32
  %v663 = vpop.permute.xlu0 %662
  %670 = vrot.lane.b32.xlu0 %v644, 64
  %v671 = vpop.permute.xlu0 %670
  %672 = vrot.lane.b32.xlu0 %v646, 64
  %v673 = vpop.permute.xlu0 %672
  %674 = vrot.lane.b32.xlu0 %v648, 64
  %v675 = vpop.permute.xlu0 %674
  %682 = vrot.lane.b32.xlu0 %v650, 96
  %v683 = vpop.permute.xlu0 %682
  %684 = vrot.lane.b32.xlu0 %v652, 96
  %v685 = vpop.permute.xlu0 %684
  %686 = vrot.lane.b32.xlu0 %v654, 96
  %v687 = vpop.permute.xlu0 %686
  %v691 = vsel %vm324, %v632, %v659
  %v692 = vsel %vm324, %v634, %v661
  %v693 = vsel %vm324, %v636, %v663
  %v694 = vsel %vm330, %v691, %v671
  %v695 = vsel %vm330, %v692, %v673
  %v696 = vsel %vm330, %v693, %v675
  %v697 = vsel %vm428, %v694, %v683
  %v698 = vsel %vm428, %v695, %v685
  %v699 = vsel %vm428, %v696, %v687
  %vm703 = vcmask 1040384
  %v704 = vrot.slane %v697, 7
  %v705 = vrot.slane %v698, 7
  %v706 = vsel %vm703, %v704, %v705
  %v707 = vrot.slane %v699, 7
  %v708 = vsel %vm703, %v705, %v707
  %v712 = vsel %vm703, %v630, %v704
  %v713 = vperm.slane %v553, 0
  %714 = vmatpush.msra.mxu0 %v552
  %715 = vmatpush.msra.mxu0 %v551
  %716 = vmatpush.msra.mxu0 %v550
  %717 = vmatpush.msra.mxu0 %v549
  %718 = vmatpush.msra.mxu0 %v548
  %719 = vmatpush.msra.mxu0 %v547
  %720 = vmatpush.msra.mxu0 %v546
  %721 = vmatpush.msra.mxu0 %v545
  %722 = vmatpush.msra.mxu0 %v544
  %723 = vmatpush.msra.mxu0 %v543
  %724 = vmatpush.msra.mxu0 %v542
  %725 = vmatpush.msra.mxu0 %v541
  %726 = vmatpush.msra.mxu0 %v540
  %727 = vmatpush.msra.mxu0 %v539
  %728 = vmatpush.msra.mxu0 %v538
  %729 = vmatpush.msra.mxu0 %v537
  %730 = vmatmul.f32.gmra.mxu0 %v628
  %v731 = vpop.f32.mrf.mxu0
  %v732 = vadd.f32 %v713, %v731
  %733 = vmatmul.f32.gmra.mxu0 %v629
  %v734 = vpop.f32.mrf.mxu0
  %v735 = vadd.f32 %v713, %v734
  %736 = vmatmul.f32.gmra.mxu0 %v712
  %v737 = vpop.f32.mrf.mxu0
  %v738 = vadd.f32 %v713, %v737
  %739 = vmatmul.f32.gmra.mxu0 %v706
  %v740 = vpop.f32.mrf.mxu0
  %v741 = vadd.f32 %v713, %v740
  %742 = vmatmul.f32.gmra.mxu0 %v708
  %v743 = vpop.f32.mrf.mxu0
  %v744 = vadd.f32 %v713, %v743
  %745 = vdwg.mxu0
  %v746 = vmax.f32 %v732, 0.0
  %v747 = vmax.f32 %v735, 0.0
  %v748 = vmax.f32 %v738, 0.0
  %v749 = vmax.f32 %v741, 0.0
  %v750 = vmax.f32 %v744, 0.0
  %v751 = vld [vmem:[%s1 + $0x100] sm:$0xff]
  %v752 = vld [vmem:[%s1 + $0x108] sm:$0xff]
  %v753 = vld [vmem:[%s1 + $0x110] sm:$0xff]
  %v754 = vld [vmem:[%s1 + $0x118] sm:$0xff]
  %v755 = vld [vmem:[%s1 + $0x120] sm:$0xff]
  %v756 = vld [vmem:[%s1 + $0x128] sm:$0xff]
  %v757 = vld [vmem:[%s1 + $0x130] sm:$0xff]
  %v758 = vld [vmem:[%s1 + $0x138] sm:$0xff]
  %v759 = vld [vmem:[%s1 + $0x140] sm:$0xff]
  %v760 = vld [vmem:[%s1 + $0x148] sm:$0xff]
  %v761 = vld [vmem:[%s1 + $0x150] sm:$0xff]
  %v762 = vld [vmem:[%s1 + $0x158] sm:$0xff]
  %v763 = vld [vmem:[%s1 + $0x160] sm:$0x1]
  %v766 = vrot.slane %v746, 1
  %v767 = vrot.slane %v747, 1
  %v768 = vsel %vm29, %v766, %v767
  %769 = vrot.lane.b32.xlu0 %v768, 32
  %v770 = vpop.permute.xlu0 %769
  %771 = vrot.lane.b32.xlu0 %v767, 32
  %v772 = vpop.permute.xlu0 %771
  %v776 = vrot.slane %v746, 2
  %v777 = vrot.slane %v747, 2
  %v778 = vsel %vm54, %v776, %v777
  %v779 = vrot.slane %v748, 2
  %v780 = vsel %vm54, %v777, %v779
  %781 = vrot.lane.b32.xlu0 %v778, 64
  %v782 = vpop.permute.xlu0 %781
  %783 = vrot.lane.b32.xlu0 %v780, 64
  %v784 = vpop.permute.xlu0 %783
  %v787 = vsel %vm324, %v746, %v770
  %v788 = vsel %vm324, %v747, %v772
  %v789 = vsel %vm330, %v787, %v782
  %v790 = vsel %vm330, %v788, %v784
  %v793 = vrot.slane %v748, 1
  %v794 = vrot.slane %v749, 1
  %v795 = vsel %vm29, %v793, %v794
  %v796 = vrot.slane %v750, 1
  %v797 = vsel %vm29, %v794, %v796
  %798 = vrot.lane.b32.xlu0 %v795, 32
  %v799 = vpop.permute.xlu0 %798
  %800 = vrot.lane.b32.xlu0 %v797, 32
  %v801 = vpop.permute.xlu0 %800
  %v804 = vrot.slane %v749, 2
  %v805 = vsel %vm54, %v779, %v804
  %v806 = vrot.slane %v750, 2
  %v807 = vsel %vm54, %v804, %v806
  %808 = vrot.lane.b32.xlu0 %v805, 64
  %v809 = vpop.permute.xlu0 %808
  %810 = vrot.lane.b32.xlu0 %v807, 64
  %v811 = vpop.permute.xlu0 %810
  %v814 = vsel %vm324, %v748, %v799
  %v815 = vsel %vm324, %v749, %v801
  %v816 = vsel %vm330, %v814, %v809
  %v817 = vsel %vm330, %v815, %v811
  %v820 = vrot.slane %v816, 2
  %v821 = vrot.slane %v817, 2
  %v822 = vsel %vm54, %v820, %v821
  %v824 = vsel %vm29, %v790, %v820
  %v825 = vperm.slane %v763, 0
  %v827 = vsel %vm428, %v789, 0
  %v830 = vsel %vm428, %v824, 0
  %v832 = vsel %vm428, %v822, 0
  %v834 = vsel %vm428, %v821, 0
  %836 = vmatpush.msra.mxu0 0.0
  %837 = vmatpush.msra.mxu0 0.0
  %838 = vmatpush.msra.mxu0 0.0
  %839 = vmatpush.msra.mxu0 0.0
  %840 = vmatpush.msra.mxu0 %v762
  %841 = vmatpush.msra.mxu0 %v761
  %842 = vmatpush.msra.mxu0 %v760
  %843 = vmatpush.msra.mxu0 %v759
  %844 = vmatpush.msra.mxu0 %v758
  %845 = vmatpush.msra.mxu0 %v757
  %846 = vmatpush.msra.mxu0 %v756
  %847 = vmatpush.msra.mxu0 %v755
  %848 = vmatpush.msra.mxu0 %v754
  %849 = vmatpush.msra.mxu0 %v753
  %850 = vmatpush.msra.mxu0 %v752
  %851 = vmatpush.msra.mxu0 %v751
  %852 = vmatmul.f32.gmra.mxu0 %v827
  %v853 = vpop.f32.mrf.mxu0
  %v854 = vadd.f32 %v825, %v853
  %855 = vmatmul.f32.gmra.mxu0 %v830
  %v856 = vpop.f32.mrf.mxu0
  %v857 = vadd.f32 %v825, %v856
  %858 = vmatmul.f32.gmra.mxu0 %v832
  %v859 = vpop.f32.mrf.mxu0
  %v860 = vadd.f32 %v825, %v859
  %861 = vmatmul.f32.gmra.mxu0 %v834
  %v862 = vpop.f32.mrf.mxu0
  %v863 = vadd.f32 %v825, %v862
  %864 = vdwg.mxu0
  %v865 = vmax.f32 %v854, 0.0
  %v866 = vmax.f32 %v857, 0.0
  %v867 = vmax.f32 %v860, 0.0
  %v868 = vmax.f32 %v863, 0.0
  %v871 = vrot.slane %v748, 3
  %v872 = vrot.slane %v749, 3
  %v873 = vsel %vm510, %v871, %v872
  %v874 = vrot.slane %v750, 3
  %v875 = vsel %vm510, %v872, %v874
  %v879 = vsel %vm29, %v767, %v871
  %v880 = vadd.f32 %v865, %v768
  %v881 = vadd.f32 %v866, %v879
  %v882 = vadd.f32 %v867, %v873
  %v883 = vadd.f32 %v868, %v875
  %v884 = vld [vmem:[%s1 + $0x168] sm:$0xff]
  %v885 = vld [vmem:[%s1 + $0x170] sm:$0xff]
  %v886 = vld [vmem:[%s1 + $0x178] sm:$0xff]
  %v887 = vld [vmem:[%s1 + $0x180] sm:$0xff]
  %v888 = vld [vmem:[%s1 + $0x188] sm:$0xff]
  %v889 = vld [vmem:[%s1 + $0x190] sm:$0xff]
  %v890 = vld [vmem:[%s1 + $0x198] sm:$0xff]
  %v891 = vld [vmem:[%s1 + $0x1a0] sm:$0xff]
  %v892 = vld [vmem:[%s1 + $0x1a8] sm:$0xff]
  %v893 = vld [vmem:[%s1 + $0x1b0] sm:$0xff]
  %v894 = vld [vmem:[%s1 + $0x1b8] sm:$0xff]
  %v895 = vld [vmem:[%s1 + $0x1c0] sm:$0xff]
  %v896 = vld [vmem:[%s1 + $0x1c8] sm:$0x1]
  %v899 = vrot.slane %v880, 1
  %v900 = vrot.slane %v881, 1
  %v901 = vsel %vm29, %v899, %v900
  %902 = vrot.lane.b32.xlu0 %v901, 32
  %v903 = vpop.permute.xlu0 %902
  %904 = vrot.lane.b32.xlu0 %v900, 32
  %v905 = vpop.permute.xlu0 %904
  %v908 = vrot.slane %v880, 2
  %v909 = vrot.slane %v881, 2
  %v910 = vsel %vm54, %v908, %v909
  %911 = vrot.lane.b32.xlu0 %v910, 64
  %v912 = vpop.permute.xlu0 %911
  %913 = vrot.lane.b32.xlu0 %v909, 64
  %v914 = vpop.permute.xlu0 %913
  %v917 = vsel %vm324, %v880, %v903
  %v918 = vsel %vm324, %v881, %v905
  %v919 = vsel %vm330, %v917, %v912
  %v920 = vsel %vm330, %v918, %v914
  %v923 = vrot.slane %v882, 1
  %v924 = vrot.slane %v883, 1
  %v925 = vsel %vm29, %v923, %v924
  %926 = vrot.lane.b32.xlu0 %v923, 32
  %v927 = vpop.permute.xlu0 %926
  %928 = vrot.lane.b32.xlu0 %v925, 32
  %v929 = vpop.permute.xlu0 %928
  %930 = vrot.lane.b32.xlu0 %v924, 32
  %v931 = vpop.permute.xlu0 %930
  %v935 = vrot.slane %v882, 2
  %v936 = vrot.slane %v883, 2
  %v937 = vsel %vm54, %v935, %v936
  %938 = vrot.lane.b32.xlu0 %v935, 64
  %v939 = vpop.permute.xlu0 %938
  %940 = vrot.lane.b32.xlu0 %v937, 64
  %v941 = vpop.permute.xlu0 %940
  %942 = vrot.lane.b32.xlu0 %v936, 64
  %v943 = vpop.permute.xlu0 %942
  %v947 = vsel %vm324, %v881, %v927
  %v948 = vsel %vm324, %v882, %v929
  %v949 = vsel %vm324, %v883, %v931
  %v950 = vsel %vm330, %v947, %v939
  %v951 = vsel %vm330, %v948, %v941
  %v952 = vsel %vm330, %v949, %v943
  %v956 = vrot.slane %v950, 2
  %v957 = vrot.slane %v951, 2
  %v958 = vsel %vm54, %v956, %v957
  %v959 = vrot.slane %v952, 2
  %v960 = vsel %vm54, %v957, %v959
  %v962 = vsel %vm510, %v920, %v958
  %v963 = vperm.slane %v896, 0
  %v965 = vsel %vm428, %v919, 0
  %v968 = vsel %vm428, %v962, 0
  %v970 = vsel %vm428, %v960, 0
  %v972 = vsel %vm428, %v959, 0
  %974 = vmatpush.msra.mxu0 0.0
  %975 = vmatpush.msra.mxu0 0.0
  %976 = vmatpush.msra.mxu0 0.0
  %977 = vmatpush.msra.mxu0 0.0
  %978 = vmatpush.msra.mxu0 %v895
  %979 = vmatpush.msra.mxu0 %v894
  %980 = vmatpush.msra.mxu0 %v893
  %981 = vmatpush.msra.mxu0 %v892
  %982 = vmatpush.msra.mxu0 %v891
  %983 = vmatpush.msra.mxu0 %v890
  %984 = vmatpush.msra.mxu0 %v889
  %985 = vmatpush.msra.mxu0 %v888
  %986 = vmatpush.msra.mxu0 %v887
  %987 = vmatpush.msra.mxu0 %v886
  %988 = vmatpush.msra.mxu0 %v885
  %989 = vmatpush.msra.mxu0 %v884
  %990 = vmatmul.f32.gmra.mxu0 %v965
  %v991 = vpop.f32.mrf.mxu0
  %v992 = vadd.f32 %v963, %v991
  %993 = vmatmul.f32.gmra.mxu0 %v968
  %v994 = vpop.f32.mrf.mxu0
  %v995 = vadd.f32 %v963, %v994
  %996 = vmatmul.f32.gmra.mxu0 %v970
  %v997 = vpop.f32.mrf.mxu0
  %v998 = vadd.f32 %v963, %v997
  %999 = vmatmul.f32.gmra.mxu0 %v972
  %v1000 = vpop.f32.mrf.mxu0
  %v1001 = vadd.f32 %v963, %v1000
  %1002 = vdwg.mxu0
  %v1003 = vmax.f32 %v992, 0.0
  %v1004 = vmax.f32 %v995, 0.0
  %v1005 = vmax.f32 %v998, 0.0
  %v1006 = vmax.f32 %v1001, 0.0
  %v1009 = vrot.slane %v882, 3
  %v1010 = vrot.slane %v883, 3
  %v1011 = vsel %vm510, %v1009, %v1010
  %v1015 = vsel %vm510, %v900, %v1009
  %v1016 = vadd.f32 %v1003, %v901
  %v1017 = vadd.f32 %v1004, %v1015
  %v1018 = vadd.f32 %v1005, %v1011
  %v1019 = vadd.f32 %v1006, %v1010
  %v1020 = vld [vmem:[%s1 + $0x1d0] sm:$0xff]
  %v1021 = vld [vmem:[%s1 + $0x1d8] sm:$0xff]
  %v1022 = vld [vmem:[%s1 + $0x1e0] sm:$0xff]
  %v1023 = vld [vmem:[%s1 + $0x1e8] sm:$0xff]
  %v1024 = vld [vmem:[%s1 + $0x1f0] sm:$0x1]
  %v1025 = vperm.slane %v1024, 0
  %v1027 = vsel %vm324, %v1016, 0
  %v1030 = vsel %vm324, %v1017, 0
  %v1033 = vsel %vm324, %v1018, 0
  %v1036 = vsel %vm324, %v1019, 0
  %1038 = vmatpush.msra.mxu0 0.0
  %1039 = vmatpush.msra.mxu0 0.0
  %1040 = vmatpush.msra.mxu0 0.0
  %1041 = vmatpush.msra.mxu0 0.0
  %1042 = vmatpush.msra.mxu0 0.0
  %1043 = vmatpush.msra.mxu0 0.0
  %1044 = vmatpush.msra.mxu0 0.0
  %1045 = vmatpush.msra.mxu0 0.0
  %1046 = vmatpush.msra.mxu0 0.0
  %1047 = vmatpush.msra.mxu0 0.0
  %1048 = vmatpush.msra.mxu0 0.0
  %1049 = vmatpush.msra.mxu0 0.0
  %1050 = vmatpush.msra.mxu0 %v1023
  %1051 = vmatpush.msra.mxu0 %v1022
  %1052 = vmatpush.msra.mxu0 %v1021
  %1053 = vmatpush.msra.mxu0 %v1020
  %1054 = vmatmul.f32.gmra.mxu0 %v1027
  %v1055 = vpop.f32.mrf.mxu0
  %v1056 = vadd.f32 %v1025, %v1055
  %1057 = vmatmul.f32.gmra.mxu0 %v1030
  %v1058 = vpop.f32.mrf.mxu0
  %v1059 = vadd.f32 %v1025, %v1058
  %1060 = vmatmul.f32.gmra.mxu0 %v1033
  %v1061 = vpop.f32.mrf.mxu0
  %v1062 = vadd.f32 %v1025, %v1061
  %1063 = vmatmul.f32.gmra.mxu0 %v1036
  %v1064 = vpop.f32.mrf.mxu0
  %v1065 = vadd.f32 %v1025, %v1064
  %1066 = vdwg.mxu0
  %v1067 = vmax.f32 %v1056, 0.0
  %v1068 = vmax.f32 %v1059, 0.0
  %v1069 = vmax.f32 %v1062, 0.0
  %v1070 = vmax.f32 %v1065, 0.0
  %v1071 = vadd.f32 %v1067, %v1016
  %v1072 = vadd.f32 %v1068, %v1017
  %v1073 = vadd.f32 %v1069, %v1018
  %v1074 = vadd.f32 %v1070, %v1019
  %v1075 = vld [vmem:[%s1 + $0x1f8] sm:$0xff]
  %v1076 = vld [vmem:[%s1 + $0x200] sm:$0xff]
  %v1077 = vld [vmem:[%s1 + $0x208] sm:$0xff]
  %v1078 = vld [vmem:[%s1 + $0x210] sm:$0xff]
  %v1079 = vld [vmem:[%s1 + $0x218] sm:$0x1]
  %v1080 = vperm.slane %v1079, 0
  %v1082 = vsel %vm324, %v1071, 0
  %v1085 = vsel %vm324, %v1072, 0
  %v1088 = vsel %vm324, %v1073, 0
  %v1091 = vsel %vm324, %v1074, 0
  %1093 = vmatpush.msra.mxu0 0.0
  %1094 = vmatpush.msra.mxu0 0.0
  %1095 = vmatpush.msra.mxu0 0.0
  %1096 = vmatpush.msra.mxu0 0.0
  %1097 = vmatpush.msra.mxu0 0.0
  %1098 = vmatpush.msra.mxu0 0.0
  %1099 = vmatpush.msra.mxu0 0.0
  %1100 = vmatpush.msra.mxu0 0.0
  %1101 = vmatpush.msra.mxu0 0.0
  %1102 = vmatpush.msra.mxu0 0.0
  %1103 = vmatpush.msra.mxu0 0.0
  %1104 = vmatpush.msra.mxu0 0.0
  %1105 = vmatpush.msra.mxu0 %v1078
  %1106 = vmatpush.msra.mxu0 %v1077
  %1107 = vmatpush.msra.mxu0 %v1076
  %1108 = vmatpush.msra.mxu0 %v1075
  %1109 = vmatmul.f32.gmra.mxu0 %v1082
  %v1110 = vpop.f32.mrf.mxu0
  %v1111 = vadd.f32 %v1080, %v1110
  %1112 = vmatmul.f32.gmra.mxu0 %v1085
  %v1113 = vpop.f32.mrf.mxu0
  %v1114 = vadd.f32 %v1080, %v1113
  %1115 = vmatmul.f32.gmra.mxu0 %v1088
  %v1116 = vpop.f32.mrf.mxu0
  %v1117 = vadd.f32 %v1080, %v1116
  %1118 = vmatmul.f32.gmra.mxu0 %v1091
  %v1119 = vpop.f32.mrf.mxu0
  %v1120 = vadd.f32 %v1080, %v1119
  %1121 = vdwg.mxu0
  %v1122 = vmax.f32 %v1111, 0.0
  %v1123 = vmax.f32 %v1114, 0.0
  %v1124 = vmax.f32 %v1117, 0.0
  %v1125 = vmax.f32 %v1120, 0.0
  %v1126 = vadd.f32 %v1122, %v1071
  %v1127 = vadd.f32 %v1123, %v1072
  %v1128 = vadd.f32 %v1124, %v1073
  %v1129 = vadd.f32 %v1125, %v1074
  %v1130 = vld [vmem:[%s1 + $0x220] sm:$0xff]
  %v1131 = vld [vmem:[%s1 + $0x228] sm:$0xff]
  %v1132 = vld [vmem:[%s1 + $0x230] sm:$0xff]
  %v1133 = vld [vmem:[%s1 + $0x238] sm:$0xff]
  %v1134 = vld [vmem:[%s1 + $0x240] sm:$0x1]
  %v1135 = vperm.slane %v1134, 0
  %v1137 = vsel %vm324, %v1126, 0
  %v1140 = vsel %vm324, %v1127, 0
  %v1143 = vsel %vm324, %v1128, 0
  %v1146 = vsel %vm324, %v1129, 0
  %1148 = vmatpush.msra.mxu0 0.0
  %1149 = vmatpush.msra.mxu0 0.0
  %1150 = vmatpush.msra.mxu0 0.0
  %1151 = vmatpush.msra.mxu0 0.0
  %1152 = vmatpush.msra.mxu0 0.0
  %1153 = vmatpush.msra.mxu0 0.0
  %1154 = vmatpush.msra.mxu0 0.0
  %1155 = vmatpush.msra.mxu0 0.0
  %1156 = vmatpush.msra.mxu0 0.0
  %1157 = vmatpush.msra.mxu0 0.0
  %1158 = vmatpush.msra.mxu0 0.0
  %1159 = vmatpush.msra.mxu0 0.0
  %1160 = vmatpush.msra.mxu0 %v1133
  %1161 = vmatpush.msra.mxu0 %v1132
  %1162 = vmatpush.msra.mxu0 %v1131
  %1163 = vmatpush.msra.mxu0 %v1130
  %1164 = vmatmul.f32.gmra.mxu0 %v1137
  %v1165 = vpop.f32.mrf.mxu0
  %v1166 = vadd.f32 %v1135, %v1165
  %1167 = vmatmul.f32.gmra.mxu0 %v1140
  %v1168 = vpop.f32.mrf.mxu0
  %v1169 = vadd.f32 %v1135, %v1168
  %1170 = vmatmul.f32.gmra.mxu0 %v1143
  %v1171 = vpop.f32.mrf.mxu0
  %v1172 = vadd.f32 %v1135, %v1171
  %1173 = vmatmul.f32.gmra.mxu0 %v1146
  %v1174 = vpop.f32.mrf.mxu0
  %v1175 = vadd.f32 %v1135, %v1174
  %1176 = vdwg.mxu0
  %v1177 = vmax.f32 %v1166, 0.0
  %v1178 = vmax.f32 %v1169, 0.0
  %v1179 = vmax.f32 %v1172, 0.0
  %v1180 = vmax.f32 %v1175, 0.0
  %v1181 = vadd.f32 %v1177, %v1126
  %v1182 = vadd.f32 %v1178, %v1127
  %v1183 = vadd.f32 %v1179, %v1128
  %v1184 = vadd.f32 %v1180, %v1129
  %v1185 = vld [vmem:[%s1 + $0x248] sm:$0xff]
  %v1186 = vld [vmem:[%s1 + $0x250] sm:$0xff]
  %v1187 = vld [vmem:[%s1 + $0x258] sm:$0xff]
  %v1188 = vld [vmem:[%s1 + $0x260] sm:$0xff]
  %v1189 = vld [vmem:[%s1 + $0x268] sm:$0x1]
  %v1190 = vperm.slane %v1189, 0
  %v1192 = vsel %vm324, %v1181, 0
  %v1195 = vsel %vm324, %v1182, 0
  %v1198 = vsel %vm324, %v1183, 0
  %v1201 = vsel %vm324, %v1184, 0
  %1203 = vmatpush.msra.mxu0 0.0
  %1204 = vmatpush.msra.mxu0 0.0
  %1205 = vmatpush.msra.mxu0 0.0
  %1206 = vmatpush.msra.mxu0 0.0
  %1207 = vmatpush.msra.mxu0 0.0
  %1208 = vmatpush.msra.mxu0 0.0
  %1209 = vmatpush.msra.mxu0 0.0
  %1210 = vmatpush.msra.mxu0 0.0
  %1211 = vmatpush.msra.mxu0 0.0
  %1212 = vmatpush.msra.mxu0 0.0
  %1213 = vmatpush.msra.mxu0 0.0
  %1214 = vmatpush.msra.mxu0 0.0
  %1215 = vmatpush.msra.mxu0 %v1188
  %1216 = vmatpush.msra.mxu0 %v1187
  %1217 = vmatpush.msra.mxu0 %v1186
  %1218 = vmatpush.msra.mxu0 %v1185
  %1219 = vmatmul.f32.gmra.mxu0 %v1192
  %v1220 = vpop.f32.mrf.mxu0
  %v1221 = vadd.f32 %v1190, %v1220
  %1222 = vmatmul.f32.gmra.mxu0 %v1195
  %v1223 = vpop.f32.mrf.mxu0
  %v1224 = vadd.f32 %v1190, %v1223
  %1225 = vmatmul.f32.gmra.mxu0 %v1198
  %v1226 = vpop.f32.mrf.mxu0
  %v1227 = vadd.f32 %v1190, %v1226
  %1228 = vmatmul.f32.gmra.mxu0 %v1201
  %v1229 = vpop.f32.mrf.mxu0
  %v1230 = vadd.f32 %v1190, %v1229
  %1231 = vdwg.mxu0
  %v1232 = vmax.f32 %v1221, 0.0
  %v1233 = vmax.f32 %v1224, 0.0
  %v1234 = vmax.f32 %v1227, 0.0
  %v1235 = vmax.f32 %v1230, 0.0
  %v1236 = vadd.f32 %v1232, %v1181
  %v1237 = vadd.f32 %v1233, %v1182
  %v1238 = vadd.f32 %v1234, %v1183
  %v1239 = vadd.f32 %v1235, %v1184
  %1240 = vst.msk [vmem:[%s2] sm:$0xff] %vm324, %v1236
  %1241 = vst.msk [vmem:[%s2 + $0x8] sm:$0xff] %vm324, %v1237
  %1242 = vst.msk [vmem:[%s2 + $0x10] sm:$0xff] %vm324, %v1238
  %vm1243 = vcmask 254976
  %1244 = vst.msk [vmem:[%s2 + $0x18] sm:$0x3] %vm1243, %v1239
  // Predicated region
  $region10: #{encoder_forward.1} parent=0 // pred_check
    _
  $region11: #{encoder_forward.1} parent=0 // pred_check_branch
    %1246 = sbr.rel (0) target = $region13
  $region12: #{encoder_forward.1} parent=0 // pred_region
    _
  $region13: #{encoder_forward.1} parent=0 // pred_fallthru
    _
  // Predicated region
  $region14: #{encoder_forward.1} parent=0 // pred_check
    _
  $region15: #{encoder_forward.1} parent=0 // pred_check_branch
    %1248 = sbr.rel (0) target = $region17
  $region16: #{encoder_forward.1} parent=0 // pred_region
    _
  $region17: #{encoder_forward.1} parent=0 // pred_fallthru
    _

</llo_original>
